<compile_context>
chip_gen: v6e
topology: v6e:2x2x1
jax: 0.10.0
libtpu: 0.0.40
codegen_flags: <defaults>
</compile_context>

<pallas_src>
import jax
import jax.numpy as jnp
from jax.experimental import pallas as pl
from jax.experimental.pallas import tpu as pltpu

LANE = 128
SUBLANE = 8
# 128 tiles * (8,128) * 4B = 512 KiB per input per pipeline buffer
# -> 2 inputs x 2 buffers = 2 MiB VMEM, fits every generation's scoped default.
MAX_TILES_PER_BLOCK = 128


def _abs_diff_partial_kernel(a_ref, b_ref, out_ref):
    # a_ref / b_ref: (tiles_per_block, 8, 128) in the parameters' native dtype.
    # Upcast inside the kernel so HBM traffic stays at native width.
    a = a_ref[...].astype(jnp.float32)
    b = b_ref[...].astype(jnp.float32)
    # Reduce only across the leading (per-vreg) axis -> lane-dense (1, 8, 128)
    # partial sum; this is pure VPU adds, no cross-lane XLU work, no scalar RMW.
    out_ref[...] = jnp.sum(jnp.abs(a - b), axis=0, keepdims=True)


def dist_l1_loss(params_a, params_b):
    """Pallas equivalent of DistL1Loss.forward(modelb)."""
    assert len(params_a) == len(params_b)

    # TODO(synk): for large models, reuse a pre-existing flat parameter buffer
    # instead of re-concatenating here (the concat/pad is an extra HBM pass).
    flat_a = jnp.concatenate([jnp.ravel(p) for p in params_a])
    flat_b = jnp.concatenate([jnp.ravel(p) for p in params_b])
    common = jnp.promote_types(flat_a.dtype, flat_b.dtype)
    flat_a = flat_a.astype(common)
    flat_b = flat_b.astype(common)

    num_params = flat_a.shape[0]
    tile_elems = SUBLANE * LANE
    tiles_total = pl.cdiv(num_params, tile_elems)
    tiles_per_block = min(MAX_TILES_PER_BLOCK, tiles_total)
    num_blocks = pl.cdiv(tiles_total, tiles_per_block)
    padded = num_blocks * tiles_per_block * tile_elems
    pad = padded - num_params

    # Zero-pad both sides identically -> padding contributes 0 to |a - b|.
    flat_a = jnp.pad(flat_a, (0, pad))
    flat_b = jnp.pad(flat_b, (0, pad))

    # (total_tiles, 8, 128): last two dims are exactly one native tile, so all
    # block shapes below satisfy the (8, 128) constraint with no reshapes in
    # the kernel.
    a3 = flat_a.reshape(-1, SUBLANE, LANE)
    b3 = flat_b.reshape(-1, SUBLANE, LANE)

    partials = pl.pallas_call(
        _abs_diff_partial_kernel,
        out_shape=jax.ShapeDtypeStruct((num_blocks, SUBLANE, LANE), jnp.float32),
        grid_spec=pltpu.PrefetchScalarGridSpec(
            num_scalar_prefetch=0,
            grid=(num_blocks,),
            in_specs=[
                pl.BlockSpec((tiles_per_block, SUBLANE, LANE),
                             lambda i: (i, 0, 0)),
                pl.BlockSpec((tiles_per_block, SUBLANE, LANE),
                             lambda i: (i, 0, 0)),
            ],
            out_specs=pl.BlockSpec((1, SUBLANE, LANE), lambda i: (i, 0, 0)),
        ),
        compiler_params=pltpu.CompilerParams(
            dimension_semantics=("parallel",)),
    )(a3, b3)

    # Tiny final reduction + mean in plain JAX.
    return jnp.sum(partials) / jnp.asarray(num_params, jnp.float32)


def _make_params(key):
    """Deterministic synthetic 'model' parameters (shapes like a tiny conv net).

    Conv weights are OIHW (matching PyTorch); layout is irrelevant for the
    parameter-space L1 loss since everything is flattened.
    """
    k1, k2, k3, k4 = jax.random.split(key, 4)
    return [
        jax.random.normal(k1, (4, 4, 3, 3), dtype=jnp.float32),   # conv weight
        jax.random.normal(k2, (4,), dtype=jnp.float32),           # conv bias
        jax.random.normal(k3, (32, 64), dtype=jnp.float32),       # fc weight
        jax.random.normal(k4, (32,), dtype=jnp.float32),          # fc bias
    ]


if __name__ == "__main__":
    root = jax.random.PRNGKey(0)
    ka, kb = jax.random.split(root)
    params_a = _make_params(ka)  # frozen "modela" parameters
    params_b = _make_params(kb)  # "modelb" parameters

    loss = dist_l1_loss(params_a, params_b)
    loss = jax.block_until_ready(loss)

    # pure-JAX reference check (same math as the PyTorch forward)
    num = sum(p.size for p in params_a)
    ref = sum(jnp.sum(jnp.abs(p1 - p2))
              for p1, p2 in zip(params_a, params_b)) / num
    assert jnp.allclose(loss, ref, rtol=1e-5, atol=1e-5), (loss, ref)

    print("KERNEL_OK")
</pallas_src>

<mosaic_0001>
module attributes {stable_mosaic.version = 11 : i64} {
  func.func @_abs_diff_partial_kernel(%arg0: i32, %arg1: memref<3x8x128xf32, #tpu.memory_space<vmem>>, %arg2: memref<3x8x128xf32, #tpu.memory_space<vmem>>, %arg3: memref<1x8x128xf32, #tpu.memory_space<vmem>>) attributes {dimension_semantics = [#tpu.dimension_semantics<parallel>], iteration_bounds = array<i64: 1>, scalar_prefetch = 0 : i64, scratch_operands = 0 : i64, tpu.core_type = #tpu.core_type<tc>, window_params = [{transform_indices = @transform_0, window_bounds = array<i64: 3, 8, 128>}, {transform_indices = @transform_1, window_bounds = array<i64: 3, 8, 128>}, {transform_indices = @transform_2, window_bounds = array<i64: 1, 8, 128>}]} {
    %c0 = arith.constant 0 : index
    %c0_0 = arith.constant 0 : index
    %c0_1 = arith.constant 0 : index
    %0 = vector.load %arg1[%c0, %c0_0, %c0_1] : memref<3x8x128xf32, #tpu.memory_space<vmem>>, vector<3x8x128xf32>
    %c0_2 = arith.constant 0 : index
    %c0_3 = arith.constant 0 : index
    %c0_4 = arith.constant 0 : index
    %1 = vector.load %arg2[%c0_2, %c0_3, %c0_4] : memref<3x8x128xf32, #tpu.memory_space<vmem>>, vector<3x8x128xf32>
    %2 = arith.subf %0, %1 : vector<3x8x128xf32>
    %3 = math.absf %2 : vector<3x8x128xf32>
    %cst = arith.constant dense<0.000000e+00> : vector<8x128xf32>
    %4 = vector.multi_reduction <add>, %3, %cst [0] : vector<3x8x128xf32> to vector<8x128xf32>
    %5 = vector.shape_cast %4 : vector<8x128xf32> to vector<1x8x128xf32>
    %c0_5 = arith.constant 0 : index
    %c0_6 = arith.constant 0 : index
    %c0_7 = arith.constant 0 : index
    %6 = vector.load %arg3[%c0_5, %c0_6, %c0_7] : memref<1x8x128xf32, #tpu.memory_space<vmem>>, vector<1x8x128xf32>
    tpu.vector_store %arg3[%c0_5, %c0_6, %c0_7], %5 {strides = array<i32>} : memref<1x8x128xf32, #tpu.memory_space<vmem>>, vector<1x8x128xf32>,
    return
  }
  func.func @transform_0(%arg0: i32) -> (i32, i32, i32) {
    %c0_i32 = arith.constant 0 : i32
    %c0_i32_0 = arith.constant 0 : i32
    %c0_i32_1 = arith.constant 0 : i32
    return %arg0, %c0_i32, %c0_i32_0 : i32, i32, i32
  }
  func.func @transform_1(%arg0: i32) -> (i32, i32, i32) {
    %c0_i32 = arith.constant 0 : i32
    %c0_i32_0 = arith.constant 0 : i32
    %c0_i32_1 = arith.constant 0 : i32
    return %arg0, %c0_i32, %c0_i32_0 : i32, i32, i32
  }
  func.func @transform_2(%arg0: i32) -> (i32, i32, i32) {
    %c0_i32 = arith.constant 0 : i32
    %c0_i32_0 = arith.constant 0 : i32
    %c0_i32_1 = arith.constant 0 : i32
    return %arg0, %c0_i32, %c0_i32_0 : i32, i32, i32
  }
}

</mosaic_0001>

<llo_original>
// kernel: tpu_custom_call.1
$region0: #{tpu_custom_call.1}
  #allocation0 [shape = 'u32[]', space=smem, size = 0x4, offset = 0x4, fixed_abs, tag = 'smem constant byte address 0x4 - core index']
  #allocation1 [shape = 'u32[144,128]{1,0:T(1,128)}', space=vmem, size = 0x12000, scoped, tag = 'internal scratch']
  %s0 = inlined_call_operand.hbm [shape: f32[3,8,128], index: 0, kind: input, shape index: {}]
  %s1 = inlined_call_operand.hbm [shape: f32[3,8,128], index: 1, kind: input, shape index: {}]
  %s2 = inlined_call_operand.hbm [shape: f32[1,8,128], index: 2, kind: output, shape index: {}]
  %s3 = sld [smem:[#allocation0]]
  $region26: #{tpu_custom_call.1} parent=0
    _
  %s5 = ssub.s32 1, %s3
  %s6 = scalar_select 0, %s5, %s3
  $region1: #{tpu_custom_call.1} parent=0
    #allocation2 [shape = 'u8[12288]{0}', space=vmem, size = 0x3000, scoped, tag = 'input window, operand 0, single buffered']
    #allocation3 [shape = 's32[1]{0}', space=sflag, size = 0x4, scoped, tag = 'scoped memory for tpu_custom_call.1']
    #allocation4 [shape = 's32[1]{0}', space=sflag, size = 0x4, scoped, tag = 'scoped memory for tpu_custom_call.1']
    #allocation5 [shape = 'u8[12288]{0}', space=vmem, size = 0x3000, scoped, tag = 'input window, operand 1, single buffered']
    #allocation6 [shape = 's32[1]{0}', space=sflag, size = 0x4, scoped, tag = 'scoped memory for tpu_custom_call.1']
    #allocation7 [shape = 'u8[4096]{0}', space=vmem, size = 0x1000, scoped, tag = 'output window, operand 0, single buffered']
    %7 = vsyncpa [#allocation3], 0
    %8 = vsyncpa [#allocation6], 0
    %9 = vsyncpa [#allocation4], 0
    // Predicated region
    $region2: #{tpu_custom_call.1} parent=1 // pred_check
      _
    $region3: #{tpu_custom_call.1} parent=1 // pred_check_branch
      %11 = sbr.rel (0) target = $region5
    $region4: #{tpu_custom_call.1} parent=1 // pred_region
      %s13 = ssub.s32 384, 384
      %14 = vsyncadd [#allocation3], %s13
      %s15 = sshll.u32 [#allocation2], 4
      %s16 = int_to_ptr.vmem [resolvable:$true] %s15
      %21 = dma.hbm_to_vmem [thread:$0]  %s0, 384, %s16, [#allocation3], 128, 128, 8
    $region5: #{tpu_custom_call.1} parent=1 // pred_fallthru
      _
    // Predicated region
    $region6: #{tpu_custom_call.1} parent=1 // pred_check
      _
    $region7: #{tpu_custom_call.1} parent=1 // pred_check_branch
      %23 = sbr.rel (0) target = $region9
    $region8: #{tpu_custom_call.1} parent=1 // pred_region
      %s25 = ssub.s32 384, 384
      %26 = vsyncadd [#allocation6], %s25
      %s27 = sshll.u32 [#allocation5], 4
      %s28 = int_to_ptr.vmem [resolvable:$true] %s27
      %33 = dma.hbm_to_vmem [thread:$0]  %s1, 384, %s28, [#allocation6], 128, 128, 8
    $region9: #{tpu_custom_call.1} parent=1 // pred_fallthru
      _
    // Predicated region
    $region10: #{tpu_custom_call.1} parent=1 // pred_check
      _
    $region11: #{tpu_custom_call.1} parent=1 // pred_check_branch
      %35 = sbr.rel (0) target = $region13
    $region12: #{tpu_custom_call.1} parent=1 // pred_region
      %36 = dma.done [#allocation3], 384
    $region13: #{tpu_custom_call.1} parent=1 // pred_fallthru
      _
    // Predicated region
    $region14: #{tpu_custom_call.1} parent=1 // pred_check
      _
    $region15: #{tpu_custom_call.1} parent=1 // pred_check_branch
      %38 = sbr.rel (0) target = $region17
    $region16: #{tpu_custom_call.1} parent=1 // pred_region
      %39 = dma.done [#allocation6], 384
    $region17: #{tpu_custom_call.1} parent=1 // pred_fallthru
      _
    %v40 = vld [vmem:[#allocation2] sm:$0xff]
    %v41 = vld [vmem:[#allocation2 + $0x8] sm:$0xff]
    %v42 = vld [vmem:[#allocation2 + $0x10] sm:$0xff]
    %v43 = vld [vmem:[#allocation5] sm:$0xff]
    %v44 = vld [vmem:[#allocation5 + $0x8] sm:$0xff]
    %v45 = vld [vmem:[#allocation5 + $0x10] sm:$0xff]
    %v46 = vsub.f32 %v40, %v43
    %v47 = vsub.f32 %v41, %v44
    %v48 = vsub.f32 %v42, %v45
    %v49 = vand.u32 2147483647, %v46
    %v50 = vand.u32 2147483647, %v47
    %v51 = vand.u32 2147483647, %v48
    %v52 = vadd.f32 %v49, %v50
    %v53 = vadd.f32 %v52, %v51
    %54 = vst [vmem:[#allocation7] sm:$0xff] %v53
    // Predicated region
    $region18: #{tpu_custom_call.1} parent=1 // pred_check
      _
    $region19: #{tpu_custom_call.1} parent=1 // pred_check_branch
      %56 = sbr.rel (0) target = $region21
    $region20: #{tpu_custom_call.1} parent=1 // pred_region
      %s58 = ssub.s32 128, 128
      %59 = vsyncadd [#allocation4], %s58
      %s61 = sshll.u32 [#allocation7], 4
      %s62 = int_to_ptr.vmem [resolvable:$true] %s61
      %64 = dma.vmem_to_hbm [thread:$0]  %s62, 128, %s2, [#allocation4]
    $region21: #{tpu_custom_call.1} parent=1 // pred_fallthru
      _
    // Predicated region
    $region22: #{tpu_custom_call.1} parent=1 // pred_check
      _
    $region23: #{tpu_custom_call.1} parent=1 // pred_check_branch
      %66 = sbr.rel (0) target = $region25
    $region24: #{tpu_custom_call.1} parent=1 // pred_region
      %67 = dma.done [#allocation4], 128
    $region25: #{tpu_custom_call.1} parent=1 // pred_fallthru
      _
    %68 = vsyncpa [#allocation3], 1
    %69 = vsyncpa [#allocation6], 1
    %70 = vsyncpa [#allocation4], 1

</llo_original>
